<compile_context>
chip_gen: v5e
topology: v5e:2x2
jax: 0.10.0
libtpu: 0.0.40
codegen_flags: <defaults>
</compile_context>

<pallas_src>
import functools

import jax
import jax.numpy as jnp
from jax.experimental import pallas as pl
from jax.experimental.pallas import tpu as pltpu

LANE = 128
SUBLANE = 8


def _round_up(x, m):
    return (x + m - 1) // m * m


# ----------------------------------------------------------------------------
# Kernel: one batch tile of the fused 3-layer MLP.
# ----------------------------------------------------------------------------
def fused_mlp_kernel(x_ref, w1_ref, b1_ref, w2_ref, b2_ref, w3_ref, b3_ref,
                     out_ref):
    """x_ref  : [TB, K1]   concat(maze, goal) features (K zero-padded if needed)
    w1_ref : [K1, H1]   block-diag(fc1_maze, fc1_goal)   (weight_dtype)
    w2_ref : [H1, H2]   block-diag(fc2_maze, fc2_goal)   (weight_dtype)
    w3_ref : [H2, Nop]  fc3 weight, lane-padded          (weight_dtype)
    b*_ref : [1, *]     biases (f32, zero-padded)
    out_ref: [TB, No]   UN-padded output block (No == full output dim)
    """
    wdt = w1_ref.dtype  # bf16 for MXU rate, f32 for the exact path
    h = jnp.dot(x_ref[...].astype(wdt), w1_ref[...],
                preferred_element_type=jnp.float32)
    h = jnp.maximum(h + b1_ref[...], 0.0)
    h = jnp.dot(h.astype(wdt), w2_ref[...],
                preferred_element_type=jnp.float32)
    h = jnp.maximum(h + b2_ref[...], 0.0)
    out = jnp.dot(h.astype(wdt), w3_ref[...],
                  preferred_element_type=jnp.float32) + b3_ref[...]
    # Only the first No lanes are real outputs; store them un-padded.
    out_ref[...] = out[:, :out_ref.shape[1]].astype(out_ref.dtype)


# ----------------------------------------------------------------------------
# Parameter handling
# ----------------------------------------------------------------------------
def init_params(key, Ni, Nh1, Nh2, No=4, dtype=jnp.float32):
    """Deterministic PyTorch-Linear-style init: U(-1/sqrt(fan_in), +1/sqrt(fan_in))."""
    def linear(k, fan_in, fan_out):
        kw, kb = jax.random.split(k)
        bound = 1.0 / jnp.sqrt(fan_in)
        w = jax.random.uniform(kw, (fan_out, fan_in), dtype, -bound, bound)  # [out, in]
        b = jax.random.uniform(kb, (fan_out,), dtype, -bound, bound)
        return w, b

    ks = jax.random.split(key, 5)
    p = {}
    p["fc1_maze"] = linear(ks[0], Ni, Nh1)
    p["fc2_maze"] = linear(ks[1], Nh1, Nh2)
    p["fc1_goal"] = linear(ks[2], Ni, Nh1)
    p["fc2_goal"] = linear(ks[3], Nh1, Nh2)
    p["fc3"] = linear(ks[4], Nh2 * 2, No)
    return p


def prepare_fused_params(params, weight_dtype=jnp.bfloat16):
    """One-time prep: transpose to [in, out], build block-diagonal fused weights,
    zero-pad feature dims to 128-lane multiples, and cast the matmul operands to
    `weight_dtype` (bf16 for MXU throughput; jnp.float32 for an exact forward).
    Biases stay f32 (bias add + ReLU are done in f32 inside the kernel)."""
    w1m, b1m = params["fc1_maze"]
    w2m, b2m = params["fc2_maze"]
    w1g, b1g = params["fc1_goal"]
    w2g, b2g = params["fc2_goal"]
    w3, b3 = params["fc3"]
    Nh1, Ni = w1m.shape
    Nh2 = w2m.shape[0]
    No = w3.shape[0]

    K1 = _round_up(2 * Ni, LANE)    # fused input width
    H1 = _round_up(2 * Nh1, LANE)   # fused hidden-1 width
    H2 = _round_up(2 * Nh2, LANE)   # fused hidden-2 width
    Nop = _round_up(No, LANE)       # lane-padded head width (sliced in-kernel)
    f32 = jnp.float32

    def blockdiag(a_t, b_t, rows, cols):
        m = jnp.zeros((rows, cols), f32)
        m = m.at[:a_t.shape[0], :a_t.shape[1]].set(a_t)
        m = m.at[a_t.shape[0]:a_t.shape[0] + b_t.shape[0],
                 a_t.shape[1]:a_t.shape[1] + b_t.shape[1]].set(b_t)
        return m

    W1 = blockdiag(w1m.T, w1g.T, K1, H1).astype(weight_dtype)
    W2 = blockdiag(w2m.T, w2g.T, H1, H2).astype(weight_dtype)
    W3 = jnp.zeros((H2, Nop), f32).at[:2 * Nh2, :No].set(w3.T).astype(weight_dtype)
    B1 = (jnp.zeros((1, H1), f32)
          .at[0, :Nh1].set(b1m).at[0, Nh1:2 * Nh1].set(b1g))
    B2 = (jnp.zeros((1, H2), f32)
          .at[0, :Nh2].set(b2m).at[0, Nh2:2 * Nh2].set(b2g))
    B3 = jnp.zeros((1, Nop), f32).at[0, :No].set(b3)
    return {"W1": W1, "B1": B1, "W2": W2, "B2": B2, "W3": W3, "B3": B3}


# ----------------------------------------------------------------------------
# Forward
# ----------------------------------------------------------------------------
def fc_nn_multi_forward(x, fused, No, block_b=2048):
    """x: [B, 2, Ni] float32 -> out: [B, No] float32."""
    W1, B1 = fused["W1"], fused["B1"]
    W2, B2 = fused["W2"], fused["B2"]
    W3, B3 = fused["W3"], fused["B3"]
    B, two, Ni = x.shape
    assert two == 2
    K1, H1 = W1.shape
    H2, Nop = W3.shape

    # concat([x[:,0,:], x[:,1,:]], -1) is a contiguous reshape — no strided slices.
    x_cat = x.reshape(B, 2 * Ni)
    # K pad must be explicit zeros: edge-lane garbage (possibly NaN) * zero
    # weight would poison valid rows.  No-op when 2*Ni is already 128-aligned.
    if K1 != 2 * Ni:
        x_cat = jnp.pad(x_cat, ((0, 0), (0, K1 - 2 * Ni)))

    # Batch tile: large to amortize per-step overhead / reach HBM roofline,
    # but split so the grid has >=2 steps (when B >= 16) so v7x's two
    # TensorCores both get work on the "parallel" axis.
    TB = min(block_b, _round_up(B, SUBLANE))
    if B >= 2 * SUBLANE:
        TB = min(TB, _round_up(pl.cdiv(B, 2), SUBLANE))
    grid = (pl.cdiv(B, TB),)   # no host-side batch pad; edge block is masked

    def resident(arr):
        # Constant index_map -> DMA'd once, resident across all batch tiles.
        # TODO(synk): pipeline_mode=pl.Buffered(1) would also drop the spare
        # double-buffer for these (small VMEM win) once verified on-target.
        return pl.BlockSpec(arr.shape, lambda i: (0, 0))

    w_bytes = sum(int(a.size) * a.dtype.itemsize for a in (W1, W2, W3))
    b_bytes = sum(int(a.size) * a.dtype.itemsize for a in (B1, B2, B3))
    cost = pl.CostEstimate(
        flops=int(2 * B * (K1 * H1 + H1 * H2 + H2 * Nop)),
        transcendentals=0,
        bytes_accessed=int(int(x_cat.size) * x_cat.dtype.itemsize
                           + B * No * 4 + w_bytes + b_bytes))

    # VMEM: double-buffered activation tiles + resident weights + live f32
    # intermediates.  Explicit limit so big TB also fits under v5e's 16 MiB
    # default scoped limit; capped well below v7x's 64 MiB physical.
    vmem_est = (2 * TB * (K1 * x_cat.dtype.itemsize + No * 4)
                + 2 * (w_bytes + b_bytes)
                + TB * (H1 + H2 + Nop) * 4)
    vmem_limit = int(min(max(32 << 20, 2 * vmem_est), 48 << 20))

    out = pl.pallas_call(
        fused_mlp_kernel,
        out_shape=jax.ShapeDtypeStruct((B, No), jnp.float32),
        grid=grid,
        in_specs=[
            pl.BlockSpec((TB, K1), lambda i: (i, 0)),
            resident(W1), resident(B1),
            resident(W2), resident(B2),
            resident(W3), resident(B3),
        ],
        out_specs=pl.BlockSpec((TB, No), lambda i: (i, 0)),
        compiler_params=pltpu.CompilerParams(
            dimension_semantics=("parallel",),
            vmem_limit_bytes=vmem_limit),
        cost_estimate=cost,
    )(x_cat, W1, B1, W2, B2, W3, B3)
    return out


def fc_nn_multi_reference(x, params):
    """Pure-JAX reference mirroring the PyTorch forward exactly."""
    def lin(h, wb):
        w, b = wb
        return h @ w.T + b
    xm = jax.nn.relu(lin(x[:, 0, :], params["fc1_maze"]))
    xm = jax.nn.relu(lin(xm, params["fc2_maze"]))
    xg = jax.nn.relu(lin(x[:, 1, :], params["fc1_goal"]))
    xg = jax.nn.relu(lin(xg, params["fc2_goal"]))
    xc = jnp.concatenate([xm, xg], axis=1)
    return lin(xc, params["fc3"])


if __name__ == "__main__":
    B, Ni, Nh1, Nh2, No = 8, 64, 32, 32, 4

    key = jax.random.PRNGKey(0)
    k_params, k_x = jax.random.split(key)
    params = init_params(k_params, Ni, Nh1, Nh2, No)
    x = jax.random.normal(k_x, (B, 2, Ni), dtype=jnp.float32)
    ref = fc_nn_multi_reference(x, params)

    fwd = jax.jit(functools.partial(fc_nn_multi_forward, No=No))

    # Exact path: f32 matmul operands — bit-matches the reference forward.
    fused_f32 = prepare_fused_params(params, weight_dtype=jnp.float32)
    out_f32 = jax.block_until_ready(fwd(x, fused_f32))
    assert out_f32.shape == (B, No)
    assert jnp.allclose(out_f32, ref, atol=1e-4, rtol=1e-5), "f32 mismatch vs reference"

    # Fast path: bf16 matmul operands, f32 accumulation (full MXU rate on
    # v5e/v6e/v7x).  Looser tolerance, as bf16 rounding is ~0.2%/element.
    fused_bf16 = prepare_fused_params(params, weight_dtype=jnp.bfloat16)
    out_bf16 = jax.block_until_ready(fwd(x, fused_bf16))
    assert out_bf16.shape == (B, No)
    assert jnp.allclose(out_bf16, ref, atol=5e-2, rtol=5e-2), "bf16 mismatch vs reference"

    print("KERNEL_OK")
</pallas_src>

<mosaic_0001>
module attributes {stable_mosaic.version = 11 : i64} {
  func.func @fused_mlp_kernel(%arg0: i32, %arg1: memref<8x128xf32, #tpu.memory_space<vmem>>, %arg2: memref<128x128xf32, #tpu.memory_space<vmem>>, %arg3: memref<1x128xf32, #tpu.memory_space<vmem>>, %arg4: memref<128x128xf32, #tpu.memory_space<vmem>>, %arg5: memref<1x128xf32, #tpu.memory_space<vmem>>, %arg6: memref<128x128xf32, #tpu.memory_space<vmem>>, %arg7: memref<1x128xf32, #tpu.memory_space<vmem>>, %arg8: memref<8x4xf32, #tpu.memory_space<vmem>>) attributes {dimension_semantics = [#tpu.dimension_semantics<parallel>], iteration_bounds = array<i64: 1>, scalar_prefetch = 0 : i64, scratch_operands = 0 : i64, tpu.core_type = #tpu.core_type<tc>, window_params = [{transform_indices = @transform_0, window_bounds = array<i64: 8, 128>}, {pipeline_mode = #tpu.pipeline_mode<synchronous>, transform_indices = @transform_1, window_bounds = array<i64: 128, 128>}, {pipeline_mode = #tpu.pipeline_mode<synchronous>, transform_indices = @transform_2, window_bounds = array<i64: 1, 128>}, {pipeline_mode = #tpu.pipeline_mode<synchronous>, transform_indices = @transform_3, window_bounds = array<i64: 128, 128>}, {pipeline_mode = #tpu.pipeline_mode<synchronous>, transform_indices = @transform_4, window_bounds = array<i64: 1, 128>}, {pipeline_mode = #tpu.pipeline_mode<synchronous>, transform_indices = @transform_5, window_bounds = array<i64: 128, 128>}, {pipeline_mode = #tpu.pipeline_mode<synchronous>, transform_indices = @transform_6, window_bounds = array<i64: 1, 128>}, {transform_indices = @transform_7, window_bounds = array<i64: 8, 4>}]} {
    %c0 = arith.constant 0 : index
    %c0_0 = arith.constant 0 : index
    %0 = vector.load %arg1[%c0, %c0_0] : memref<8x128xf32, #tpu.memory_space<vmem>>, vector<8x128xf32>
    %c0_1 = arith.constant 0 : index
    %c0_2 = arith.constant 0 : index
    %1 = vector.load %arg2[%c0_1, %c0_2] : memref<128x128xf32, #tpu.memory_space<vmem>>, vector<128x128xf32>
    %cst = arith.constant dense<0.000000e+00> : vector<8x128xf32>
    %2 = tpu.matmul %0, %1, %cst {dimension_numbers = #tpu.dot_dimension_numbers<[1], [0], [0], [1], [0, 0, 1, 1], [], []>} : vector<8x128xf32>, vector<128x128xf32>, vector<8x128xf32> -> vector<8x128xf32>
    %c0_3 = arith.constant 0 : index
    %c0_4 = arith.constant 0 : index
    %3 = vector.load %arg3[%c0_3, %c0_4] : memref<1x128xf32, #tpu.memory_space<vmem>>, vector<1x128xf32>
    %4 = vector.broadcast %3 : vector<1x128xf32> to vector<8x128xf32>
    %5 = arith.addf %2, %4 : vector<8x128xf32>
    %cst_5 = arith.constant 0.000000e+00 : f32
    %6 = vector.broadcast %cst_5 : f32 to vector<8x128xf32>
    %7 = arith.maximumf %5, %6 : vector<8x128xf32>
    %c0_6 = arith.constant 0 : index
    %c0_7 = arith.constant 0 : index
    %8 = vector.load %arg4[%c0_6, %c0_7] : memref<128x128xf32, #tpu.memory_space<vmem>>, vector<128x128xf32>
    %cst_8 = arith.constant dense<0.000000e+00> : vector<8x128xf32>
    %9 = tpu.matmul %7, %8, %cst_8 {dimension_numbers = #tpu.dot_dimension_numbers<[1], [0], [0], [1], [0, 0, 1, 1], [], []>} : vector<8x128xf32>, vector<128x128xf32>, vector<8x128xf32> -> vector<8x128xf32>
    %c0_9 = arith.constant 0 : index
    %c0_10 = arith.constant 0 : index
    %10 = vector.load %arg5[%c0_9, %c0_10] : memref<1x128xf32, #tpu.memory_space<vmem>>, vector<1x128xf32>
    %11 = vector.broadcast %10 : vector<1x128xf32> to vector<8x128xf32>
    %12 = arith.addf %9, %11 : vector<8x128xf32>
    %cst_11 = arith.constant 0.000000e+00 : f32
    %13 = vector.broadcast %cst_11 : f32 to vector<8x128xf32>
    %14 = arith.maximumf %12, %13 : vector<8x128xf32>
    %c0_12 = arith.constant 0 : index
    %c0_13 = arith.constant 0 : index
    %15 = vector.load %arg6[%c0_12, %c0_13] : memref<128x128xf32, #tpu.memory_space<vmem>>, vector<128x128xf32>
    %cst_14 = arith.constant dense<0.000000e+00> : vector<8x128xf32>
    %16 = tpu.matmul %14, %15, %cst_14 {dimension_numbers = #tpu.dot_dimension_numbers<[1], [0], [0], [1], [0, 0, 1, 1], [], []>} : vector<8x128xf32>, vector<128x128xf32>, vector<8x128xf32> -> vector<8x128xf32>
    %c0_15 = arith.constant 0 : index
    %c0_16 = arith.constant 0 : index
    %17 = vector.load %arg7[%c0_15, %c0_16] : memref<1x128xf32, #tpu.memory_space<vmem>>, vector<1x128xf32>
    %18 = vector.broadcast %17 : vector<1x128xf32> to vector<8x128xf32>
    %19 = arith.addf %16, %18 : vector<8x128xf32>
    %20 = vector.extract_strided_slice %19 {offsets = [0, 0], sizes = [8, 4], strides = [1, 1]} : vector<8x128xf32> to vector<8x4xf32>
    %c0_17 = arith.constant 0 : index
    %c0_18 = arith.constant 0 : index
    %21 = vector.load %arg8[%c0_17, %c0_18] : memref<8x4xf32, #tpu.memory_space<vmem>>, vector<8x4xf32>
    tpu.vector_store %arg8[%c0_17, %c0_18], %20 {strides = array<i32>} : memref<8x4xf32, #tpu.memory_space<vmem>>, vector<8x4xf32>,
    return
  }
  func.func @transform_0(%arg0: i32) -> (i32, i32) {
    %c0_i32 = arith.constant 0 : i32
    %c0_i32_0 = arith.constant 0 : i32
    return %arg0, %c0_i32 : i32, i32
  }
  func.func @transform_1(%arg0: i32) -> (i32, i32) {
    %c0_i32 = arith.constant 0 : i32
    %c0_i32_0 = arith.constant 0 : i32
    %c0_i32_1 = arith.constant 0 : i32
    return %c0_i32, %c0_i32_0 : i32, i32
  }
  func.func @transform_2(%arg0: i32) -> (i32, i32) {
    %c0_i32 = arith.constant 0 : i32
    %c0_i32_0 = arith.constant 0 : i32
    %c0_i32_1 = arith.constant 0 : i32
    return %c0_i32, %c0_i32_0 : i32, i32
  }
  func.func @transform_3(%arg0: i32) -> (i32, i32) {
    %c0_i32 = arith.constant 0 : i32
    %c0_i32_0 = arith.constant 0 : i32
    %c0_i32_1 = arith.constant 0 : i32
    return %c0_i32, %c0_i32_0 : i32, i32
  }
  func.func @transform_4(%arg0: i32) -> (i32, i32) {
    %c0_i32 = arith.constant 0 : i32
    %c0_i32_0 = arith.constant 0 : i32
    %c0_i32_1 = arith.constant 0 : i32
    return %c0_i32, %c0_i32_0 : i32, i32
  }
  func.func @transform_5(%arg0: i32) -> (i32, i32) {
    %c0_i32 = arith.constant 0 : i32
    %c0_i32_0 = arith.constant 0 : i32
    %c0_i32_1 = arith.constant 0 : i32
    return %c0_i32, %c0_i32_0 : i32, i32
  }
  func.func @transform_6(%arg0: i32) -> (i32, i32) {
    %c0_i32 = arith.constant 0 : i32
    %c0_i32_0 = arith.constant 0 : i32
    %c0_i32_1 = arith.constant 0 : i32
    return %c0_i32, %c0_i32_0 : i32, i32
  }
  func.func @transform_7(%arg0: i32) -> (i32, i32) {
    %c0_i32 = arith.constant 0 : i32
    %c0_i32_0 = arith.constant 0 : i32
    return %arg0, %c0_i32 : i32, i32
  }
}

</mosaic_0001>

<llo_original>
// kernel: fc_nn_multi_forward.1
$region0: #{fc_nn_multi_forward.1}
  #allocation0 [shape = 'u32[]', space=smem, size = 0x4, offset = 0x4, fixed_abs, tag = 'smem constant byte address 0x4 - core index']
  #allocation1 [shape = 'u32[72,128]{1,0:T(1,128)}', space=vmem, size = 0x9000, scoped, tag = 'internal scratch']
  %s0 = inlined_call_operand.vmem [shape: f32[8,128], index: 0, kind: input, shape index: {}]
  %s1 = inlined_call_operand.hbm [shape: f32[128,128], index: 1, kind: input, shape index: {}]
  %s2 = inlined_call_operand.vmem [shape: f32[1,128], index: 2, kind: input, shape index: {}]
  %s3 = inlined_call_operand.hbm [shape: f32[128,128], index: 3, kind: input, shape index: {}]
  %s4 = inlined_call_operand.vmem [shape: f32[1,128], index: 4, kind: input, shape index: {}]
  %s5 = inlined_call_operand.hbm [shape: f32[128,128], index: 5, kind: input, shape index: {}]
  %s6 = inlined_call_operand.vmem [shape: f32[1,128], index: 6, kind: input, shape index: {}]
  %s7 = inlined_call_operand.vmem [shape: f32[8,4], index: 7, kind: output, shape index: {}]
  %s8 = sld [smem:[#allocation0]]
  $region50: #{fc_nn_multi_forward.1} parent=0
    _
  %s10 = ssub.s32 1, %s8
  %s11 = scalar_select 0, %s10, %s8
  $region1: #{fc_nn_multi_forward.1} parent=0
    #allocation2 [shape = 'u8[65536]{0}', space=vmem, size = 0x10000, scoped, tag = 'input window, operand 1, single buffered']
    #allocation3 [shape = 's32[1]{0}', space=sflag, size = 0x4, scoped, tag = 'scoped memory for fc_nn_multi_forward.1']
    #allocation4 [shape = 'u8[65536]{0}', space=vmem, size = 0x10000, scoped, tag = 'input window, operand 3, single buffered']
    #allocation5 [shape = 's32[1]{0}', space=sflag, size = 0x4, scoped, tag = 'scoped memory for fc_nn_multi_forward.1']
    #allocation6 [shape = 'u8[65536]{0}', space=vmem, size = 0x10000, scoped, tag = 'input window, operand 5, single buffered']
    %12 = vsyncpa [#allocation3], 0
    %13 = vsyncpa [#allocation5], 0
    // Predicated region
    $region2: #{fc_nn_multi_forward.1} parent=1 // pred_check
      _
    $region3: #{fc_nn_multi_forward.1} parent=1 // pred_check_branch
      %15 = sbr.rel (0) target = $region5
    $region4: #{fc_nn_multi_forward.1} parent=1 // pred_region
      _
    $region5: #{fc_nn_multi_forward.1} parent=1 // pred_fallthru
      _
    // Predicated region
    $region6: #{fc_nn_multi_forward.1} parent=1 // pred_check
      _
    $region7: #{fc_nn_multi_forward.1} parent=1 // pred_check_branch
      %17 = sbr.rel (0) target = $region9
    $region8: #{fc_nn_multi_forward.1} parent=1 // pred_region
      %19 = vsyncadd [#allocation3], 0
      %s20 = sshll.u32 %s1, 4
      %s21 = int_to_ptr.hbm [resolvable:$true] %s20
      %s22 = sshll.u32 [#allocation2], 4
      %s23 = int_to_ptr.vmem [resolvable:$true] %s22
      %28 = dma.hbm_to_vmem [thread:$0]  %s21, 2048, %s23, [#allocation3], 128, 128, 8
    $region9: #{fc_nn_multi_forward.1} parent=1 // pred_fallthru
      _
    // Predicated region
    $region10: #{fc_nn_multi_forward.1} parent=1 // pred_check
      _
    $region11: #{fc_nn_multi_forward.1} parent=1 // pred_check_branch
      %30 = sbr.rel (0) target = $region13
    $region12: #{fc_nn_multi_forward.1} parent=1 // pred_region
      _
    $region13: #{fc_nn_multi_forward.1} parent=1 // pred_fallthru
      _
    // Predicated region
    $region14: #{fc_nn_multi_forward.1} parent=1 // pred_check
      _
    $region15: #{fc_nn_multi_forward.1} parent=1 // pred_check_branch
      %32 = sbr.rel (0) target = $region17
    $region16: #{fc_nn_multi_forward.1} parent=1 // pred_region
      %34 = vsyncadd [#allocation5], 0
      %s35 = sshll.u32 %s3, 4
      %s36 = int_to_ptr.hbm [resolvable:$true] %s35
      %s37 = sshll.u32 [#allocation4], 4
      %s38 = int_to_ptr.vmem [resolvable:$true] %s37
      %43 = dma.hbm_to_vmem [thread:$0]  %s36, 2048, %s38, [#allocation5], 128, 128, 8
    $region17: #{fc_nn_multi_forward.1} parent=1 // pred_fallthru
      _
    // Predicated region
    $region18: #{fc_nn_multi_forward.1} parent=1 // pred_check
      _
    $region19: #{fc_nn_multi_forward.1} parent=1 // pred_check_branch
      %45 = sbr.rel (0) target = $region21
    $region20: #{fc_nn_multi_forward.1} parent=1 // pred_region
      _
    $region21: #{fc_nn_multi_forward.1} parent=1 // pred_fallthru
      _
    // Predicated region
    $region22: #{fc_nn_multi_forward.1} parent=1 // pred_check
      _
    $region23: #{fc_nn_multi_forward.1} parent=1 // pred_check_branch
      %47 = sbr.rel (0) target = $region25
    $region24: #{fc_nn_multi_forward.1} parent=1 // pred_region
      %49 = vsyncadd [#allocation5], 0
      %s50 = sshll.u32 %s5, 4
      %s51 = int_to_ptr.hbm [resolvable:$true] %s50
      %s52 = sshll.u32 [#allocation6], 4
      %s53 = int_to_ptr.vmem [resolvable:$true] %s52
      %58 = dma.hbm_to_vmem [thread:$0]  %s51, 2048, %s53, [#allocation5], 128, 128, 8
    $region25: #{fc_nn_multi_forward.1} parent=1 // pred_fallthru
      _
    // Predicated region
    $region26: #{fc_nn_multi_forward.1} parent=1 // pred_check
      _
    $region27: #{fc_nn_multi_forward.1} parent=1 // pred_check_branch
      %60 = sbr.rel (0) target = $region29
    $region28: #{fc_nn_multi_forward.1} parent=1 // pred_region
      _
    $region29: #{fc_nn_multi_forward.1} parent=1 // pred_fallthru
      _
    // Predicated region
    $region30: #{fc_nn_multi_forward.1} parent=1 // pred_check
      _
    $region31: #{fc_nn_multi_forward.1} parent=1 // pred_check_branch
      %62 = sbr.rel (0) target = $region33
    $region32: #{fc_nn_multi_forward.1} parent=1 // pred_region
      %64 = dma.done [#allocation3], 2048
    $region33: #{fc_nn_multi_forward.1} parent=1 // pred_fallthru
      _
    // Predicated region
    $region34: #{fc_nn_multi_forward.1} parent=1 // pred_check
      _
    $region35: #{fc_nn_multi_forward.1} parent=1 // pred_check_branch
      %66 = sbr.rel (0) target = $region37
    $region36: #{fc_nn_multi_forward.1} parent=1 // pred_region
      %68 = dma.done [#allocation5], 2048
    $region37: #{fc_nn_multi_forward.1} parent=1 // pred_fallthru
      _
    // Predicated region
    $region38: #{fc_nn_multi_forward.1} parent=1 // pred_check
      _
    $region39: #{fc_nn_multi_forward.1} parent=1 // pred_check_branch
      %70 = sbr.rel (0) target = $region41
    $region40: #{fc_nn_multi_forward.1} parent=1 // pred_region
      %72 = dma.done [#allocation5], 2048
    $region41: #{fc_nn_multi_forward.1} parent=1 // pred_fallthru
      _
    %v73 = vld [vmem:[%s0] sm:$0xff]
    %v74 = vld [vmem:[#allocation2] sm:$0xff]
    %v75 = vld [vmem:[#allocation2 + $0x8] sm:$0xff]
    %v76 = vld [vmem:[#allocation2 + $0x10] sm:$0xff]
    %v77 = vld [vmem:[#allocation2 + $0x18] sm:$0xff]
    %v78 = vld [vmem:[#allocation2 + $0x20] sm:$0xff]
    %v79 = vld [vmem:[#allocation2 + $0x28] sm:$0xff]
    %v80 = vld [vmem:[#allocation2 + $0x30] sm:$0xff]
    %v81 = vld [vmem:[#allocation2 + $0x38] sm:$0xff]
    %v82 = vld [vmem:[#allocation2 + $0x40] sm:$0xff]
    %v83 = vld [vmem:[#allocation2 + $0x48] sm:$0xff]
    %v84 = vld [vmem:[#allocation2 + $0x50] sm:$0xff]
    %v85 = vld [vmem:[#allocation2 + $0x58] sm:$0xff]
    %v86 = vld [vmem:[#allocation2 + $0x60] sm:$0xff]
    %v87 = vld [vmem:[#allocation2 + $0x68] sm:$0xff]
    %v88 = vld [vmem:[#allocation2 + $0x70] sm:$0xff]
    %v89 = vld [vmem:[#allocation2 + $0x78] sm:$0xff]
    %v90 = vld [vmem:[%s2] sm:$0x1]
    %v92 = vperm.slane %v90, 0
    %94 = vmatpush.msra.mxu0 %v89
    %95 = vmatpush.msra.mxu0 %v88
    %96 = vmatpush.msra.mxu0 %v87
    %97 = vmatpush.msra.mxu0 %v86
    %98 = vmatpush.msra.mxu0 %v85
    %99 = vmatpush.msra.mxu0 %v84
    %100 = vmatpush.msra.mxu0 %v83
    %101 = vmatpush.msra.mxu0 %v82
    %102 = vmatpush.msra.mxu0 %v81
    %103 = vmatpush.msra.mxu0 %v80
    %104 = vmatpush.msra.mxu0 %v79
    %105 = vmatpush.msra.mxu0 %v78
    %106 = vmatpush.msra.mxu0 %v77
    %107 = vmatpush.msra.mxu0 %v76
    %108 = vmatpush.msra.mxu0 %v75
    %109 = vmatpush.msra.mxu0 %v74
    %110 = vmatmul.f32.gmra.mxu0 %v73
    %v111 = vpop.f32.mrf.mxu0
    %v112 = vadd.f32 %v92, %v111
    %113 = vdwg.mxu0
    %v114 = vmax.f32 %v112, 0.0
    %v115 = vld [vmem:[#allocation4] sm:$0xff]
    %v116 = vld [vmem:[#allocation4 + $0x8] sm:$0xff]
    %v117 = vld [vmem:[#allocation4 + $0x10] sm:$0xff]
    %v118 = vld [vmem:[#allocation4 + $0x18] sm:$0xff]
    %v119 = vld [vmem:[#allocation4 + $0x20] sm:$0xff]
    %v120 = vld [vmem:[#allocation4 + $0x28] sm:$0xff]
    %v121 = vld [vmem:[#allocation4 + $0x30] sm:$0xff]
    %v122 = vld [vmem:[#allocation4 + $0x38] sm:$0xff]
    %v123 = vld [vmem:[#allocation4 + $0x40] sm:$0xff]
    %v124 = vld [vmem:[#allocation4 + $0x48] sm:$0xff]
    %v125 = vld [vmem:[#allocation4 + $0x50] sm:$0xff]
    %v126 = vld [vmem:[#allocation4 + $0x58] sm:$0xff]
    %v127 = vld [vmem:[#allocation4 + $0x60] sm:$0xff]
    %v128 = vld [vmem:[#allocation4 + $0x68] sm:$0xff]
    %v129 = vld [vmem:[#allocation4 + $0x70] sm:$0xff]
    %v130 = vld [vmem:[#allocation4 + $0x78] sm:$0xff]
    %v131 = vld [vmem:[%s4] sm:$0x1]
    %v133 = vperm.slane %v131, 0
    %135 = vmatpush.msra.mxu0 %v130
    %136 = vmatpush.msra.mxu0 %v129
    %137 = vmatpush.msra.mxu0 %v128
    %138 = vmatpush.msra.mxu0 %v127
    %139 = vmatpush.msra.mxu0 %v126
    %140 = vmatpush.msra.mxu0 %v125
    %141 = vmatpush.msra.mxu0 %v124
    %142 = vmatpush.msra.mxu0 %v123
    %143 = vmatpush.msra.mxu0 %v122
    %144 = vmatpush.msra.mxu0 %v121
    %145 = vmatpush.msra.mxu0 %v120
    %146 = vmatpush.msra.mxu0 %v119
    %147 = vmatpush.msra.mxu0 %v118
    %148 = vmatpush.msra.mxu0 %v117
    %149 = vmatpush.msra.mxu0 %v116
    %150 = vmatpush.msra.mxu0 %v115
    %151 = vmatmul.f32.gmra.mxu0 %v114
    %v152 = vpop.f32.mrf.mxu0
    %v153 = vadd.f32 %v133, %v152
    %154 = vdwg.mxu0
    %v155 = vmax.f32 %v153, 0.0
    %v156 = vld [vmem:[#allocation6] sm:$0xff]
    %v157 = vld [vmem:[#allocation6 + $0x8] sm:$0xff]
    %v158 = vld [vmem:[#allocation6 + $0x10] sm:$0xff]
    %v159 = vld [vmem:[#allocation6 + $0x18] sm:$0xff]
    %v160 = vld [vmem:[#allocation6 + $0x20] sm:$0xff]
    %v161 = vld [vmem:[#allocation6 + $0x28] sm:$0xff]
    %v162 = vld [vmem:[#allocation6 + $0x30] sm:$0xff]
    %v163 = vld [vmem:[#allocation6 + $0x38] sm:$0xff]
    %v164 = vld [vmem:[#allocation6 + $0x40] sm:$0xff]
    %v165 = vld [vmem:[#allocation6 + $0x48] sm:$0xff]
    %v166 = vld [vmem:[#allocation6 + $0x50] sm:$0xff]
    %v167 = vld [vmem:[#allocation6 + $0x58] sm:$0xff]
    %v168 = vld [vmem:[#allocation6 + $0x60] sm:$0xff]
    %v169 = vld [vmem:[#allocation6 + $0x68] sm:$0xff]
    %v170 = vld [vmem:[#allocation6 + $0x70] sm:$0xff]
    %v171 = vld [vmem:[#allocation6 + $0x78] sm:$0xff]
    %v172 = vld [vmem:[%s6] sm:$0x1]
    %v174 = vperm.slane %v172, 0
    %176 = vmatpush.msra.mxu0 %v171
    %177 = vmatpush.msra.mxu0 %v170
    %178 = vmatpush.msra.mxu0 %v169
    %179 = vmatpush.msra.mxu0 %v168
    %180 = vmatpush.msra.mxu0 %v167
    %181 = vmatpush.msra.mxu0 %v166
    %182 = vmatpush.msra.mxu0 %v165
    %183 = vmatpush.msra.mxu0 %v164
    %184 = vmatpush.msra.mxu0 %v163
    %185 = vmatpush.msra.mxu0 %v162
    %186 = vmatpush.msra.mxu0 %v161
    %187 = vmatpush.msra.mxu0 %v160
    %188 = vmatpush.msra.mxu0 %v159
    %189 = vmatpush.msra.mxu0 %v158
    %190 = vmatpush.msra.mxu0 %v157
    %191 = vmatpush.msra.mxu0 %v156
    %192 = vmatmul.f32.gmra.mxu0 %v155
    %v193 = vpop.f32.mrf.mxu0
    %v194 = vadd.f32 %v174, %v193
    %195 = vdwg.mxu0
    %vm196 = vcmask 31744
    %197 = vst.msk [vmem:[%s7] sm:$0xff] %vm196, %v194
    // Predicated region
    $region42: #{fc_nn_multi_forward.1} parent=1 // pred_check
      _
    $region43: #{fc_nn_multi_forward.1} parent=1 // pred_check_branch
      %199 = sbr.rel (0) target = $region45
    $region44: #{fc_nn_multi_forward.1} parent=1 // pred_region
      _
    $region45: #{fc_nn_multi_forward.1} parent=1 // pred_fallthru
      _
    // Predicated region
    $region46: #{fc_nn_multi_forward.1} parent=1 // pred_check
      _
    $region47: #{fc_nn_multi_forward.1} parent=1 // pred_check_branch
      %201 = sbr.rel (0) target = $region49
    $region48: #{fc_nn_multi_forward.1} parent=1 // pred_region
      _
    $region49: #{fc_nn_multi_forward.1} parent=1 // pred_fallthru
      _
    %202 = vsyncpa [#allocation3], 1
    %203 = vsyncpa [#allocation5], 1

</llo_original>
